<compile_context>
chip_gen: v7x
topology: tpu7x:2x2x1
jax: 0.10.0
libtpu: 0.0.40
codegen_flags: <defaults>
</compile_context>

<pallas_src>
import functools

import jax
import jax.numpy as jnp
from jax.experimental import pallas as pl
from jax.experimental.pallas import tpu as pltpu


def _round_up(x, m):
    return (x + m - 1) // m * m


# ----------------------------------------------------------------------------
# Path A: small graphs — fused one-hot MXU gather.
# ----------------------------------------------------------------------------
def _metalayer_onehot_kernel(r_ref, c_ref, eattr_ref, p_ref, w_e_ref, out_ref):
    """One grid step processes a tile of TE edges.

    r_ref     : (TE, 1)   int32  row endpoint r[e]           (index into [0, N))
    c_ref     : (TE, 1)   int32  col endpoint c[e] + N       (index into [N, 2N))
    eattr_ref : (TE, Fe+1)       edge attrs with a trailing 1.0 column (bias fold)
    p_ref     : (2N, Fp)         stacked [feats@W_r ; feats@W_c]   (grid-invariant)
    w_e_ref   : (Fe+1, Fp)       [W_e ; bias]                      (grid-invariant)
    out_ref   : (TE, Fp)  f32    new edge attributes (lane-dense, Fp = pad128(Fout))
    """
    two_n = p_ref.shape[0]
    # (1, 2N) iota, broadcast against the (TE, 1) index columns: the full (TE, 2N)
    # one-hot only materializes inside the compares, not as an explicit iota.
    iota = jax.lax.broadcasted_iota(jnp.int32, (1, two_n), 1)
    hot = jnp.logical_or(iota == r_ref[...], iota == c_ref[...])
    # Exact 0/1, so casting to the (possibly bf16) MXU operand dtype is lossless.
    oh = hot.astype(jnp.float32).astype(p_ref.dtype)

    out = (jnp.dot(oh, p_ref[...], preferred_element_type=jnp.float32)        # f_r@W_r + f_c@W_c
           + jnp.dot(eattr_ref[...], w_e_ref[...],                            # e@W_e + bias
                     preferred_element_type=jnp.float32))
    out_ref[...] = out.astype(out_ref.dtype)


# ----------------------------------------------------------------------------
# Path B: larger graphs — scalar-prefetch indices + per-row DMA gather from HBM.
# ----------------------------------------------------------------------------
def _metalayer_gather_kernel(r_sm, c_sm, eattr_ref, w_e_ref, p_hbm, out_ref,
                             gr_buf, gc_buf, sems):
    """One grid step gathers the 2*TE needed rows of P straight from HBM.

    r_sm, c_sm : (E_pad,) int32 in SMEM (scalar prefetch; c already offset by N)
    eattr_ref  : (TE, Fe+1)   edge attrs with 1.0 column
    w_e_ref    : (Fe+1, Fp)   [W_e ; bias]
    p_hbm      : (2N, Fp)     stacked P table, left in HBM (memory_space=pl.ANY)
    out_ref    : (TE, Fp) f32
    gr_buf/gc_buf : (TE, Fp) VMEM scratch for the gathered r / c rows
    sems       : DMA semaphores, one per gather buffer
    """
    te = out_ref.shape[0]
    base = pl.program_id(0) * te

    # Issue all 2*TE row copies up front; copies of equal size share one semaphore
    # per destination buffer, so the aggregated waits below are exact.
    @pl.loop(0, te)
    def _issue(i):
        r = r_sm[base + i]
        c = c_sm[base + i]
        pltpu.make_async_copy(p_hbm.at[pl.ds(r, 1), :],
                              gr_buf.at[pl.ds(i, 1), :], sems.at[0]).start()
        pltpu.make_async_copy(p_hbm.at[pl.ds(c, 1), :],
                              gc_buf.at[pl.ds(i, 1), :], sems.at[1]).start()

    # Independent MXU work overlaps with the in-flight row gathers.
    eattr_part = jnp.dot(eattr_ref[...], w_e_ref[...],
                         preferred_element_type=jnp.float32)

    @pl.loop(0, te)
    def _drain(i):
        pltpu.make_async_copy(p_hbm.at[pl.ds(0, 1), :],
                              gr_buf.at[pl.ds(i, 1), :], sems.at[0]).wait()
        pltpu.make_async_copy(p_hbm.at[pl.ds(0, 1), :],
                              gc_buf.at[pl.ds(i, 1), :], sems.at[1]).wait()

    out_ref[...] = (eattr_part
                    + gr_buf[...].astype(jnp.float32)
                    + gc_buf[...].astype(jnp.float32)).astype(out_ref.dtype)


# ----------------------------------------------------------------------------
# Wrapper.
# ----------------------------------------------------------------------------
@functools.partial(
    jax.jit,
    static_argnames=("edge_tile", "mxu_dtype", "precompute_precision",
                     "gather", "onehot_max_2n"))
def meta_layer_forward(feats, edge_index, edge_attr, w, b, *,
                       edge_tile=256, mxu_dtype=jnp.float32,
                       precompute_precision=None, gather=None,
                       onehot_max_2n=512):
    """MetaLayer.forward with edge_model = Linear(2F+Fe -> Fout), node_model = None.

    w: (2F+Fe, Fout)  -- already transposed relative to torch.nn.Linear.weight
    b: (Fout,)
    Returns (feats, edge_index, new_edge_attr) exactly like the PyTorch module.
    """
    n, f = feats.shape
    e, fe = edge_attr.shape
    fout = w.shape[1]
    out_dtype = jnp.float32

    if e == 0:  # zero-size grid guard
        return feats, edge_index, jnp.zeros((0, fout), out_dtype)

    # ---- Hoist the weight contraction out of the per-edge grid ----------------
    # cat([feats[r], feats[c], e, 1]) @ [W_r; W_c; W_e; bias]
    #   == (feats@W_r)[r] + (feats@W_c)[c] + [e, 1] @ [W_e; bias]
    w_r, w_c, w_e = w[:f, :], w[f:2 * f, :], w[2 * f:, :]
    p_stack = jnp.concatenate(
        [jnp.dot(feats, w_r, precision=precompute_precision),
         jnp.dot(feats, w_c, precision=precompute_precision)], axis=0)     # (2N, Fout)
    w_e_aug = jnp.concatenate([w_e, b.reshape(1, fout)], axis=0)           # (Fe+1, Fout)
    fe1 = fe + 1

    # ---- Lane-dense output: pad Fout up to a multiple of 128 ------------------
    fp = _round_up(fout, 128)
    if fp != fout:
        p_stack = jnp.pad(p_stack, ((0, 0), (0, fp - fout)))
        w_e_aug = jnp.pad(w_e_aug, ((0, 0), (0, fp - fout)))
    p_stack = p_stack.astype(mxu_dtype)
    w_e_aug = w_e_aug.astype(mxu_dtype)

    # ---- Adaptive edge tile ----------------------------------------------------
    te = max(8, min(_round_up(edge_tile, 8), _round_up(e, 8)))
    # Keep >= 2 grid steps when the edge count allows, so the "parallel" edge axis
    # can shard across both v7x TensorCores (harmless ~0.35us extra elsewhere).
    if _round_up(e, te) // te < 2 and te >= 16:
        te = _round_up(te // 2, 8)
    e_pad = _round_up(e, te)
    num_tiles = e_pad // te

    # ---- Edge-side operands (bias-fold column, remainder padding) -------------
    eattr_aug = jnp.concatenate(
        [edge_attr, jnp.ones((e, 1), edge_attr.dtype)], axis=1).astype(mxu_dtype)
    r_idx = edge_index[:, 0].astype(jnp.int32)
    c_idx = edge_index[:, 1].astype(jnp.int32) + n          # offset into the W_c half
    if e_pad != e:
        pad = e_pad - e
        # Padding edges point at row 0 of P; their outputs are sliced off below.
        eattr_aug = jnp.pad(eattr_aug, ((0, pad), (0, 0)))
        r_idx = jnp.pad(r_idx, (0, pad))
        c_idx = jnp.pad(c_idx, (0, pad))

    use_gather = (2 * n > onehot_max_2n) if gather is None else bool(gather)
    dsize = jnp.dtype(mxu_dtype).itemsize

    # ---- VMEM budget + cost estimate -------------------------------------------
    if not use_gather:
        need = (2 * (2 * te * 4 + te * fe1 * dsize + te * fp * 4)        # rotating tiles (x2 buf)
                + 2 * (2 * n * fp * dsize + fe1 * fp * dsize)            # invariant tables (x2 buf)
                + te * 2 * n * 4                                         # one-hot temporaries
                + (4 << 20))
        flops = 2 * e_pad * (2 * n + fe1) * fp
        bytes_acc = (e_pad * (2 * 4 + fe1 * dsize + fp * 4)
                     + (2 * n + fe1) * fp * dsize)
    else:
        need = (2 * (te * fe1 * dsize + te * fp * 4 + fe1 * fp * dsize)
                + 2 * te * fp * dsize                                    # gather scratch
                + (4 << 20))
        flops = 2 * e_pad * fe1 * fp + 2 * e_pad * fp
        bytes_acc = (e_pad * (2 * 4 + fe1 * dsize + fp * 4 + 2 * fp * dsize)
                     + fe1 * fp * dsize)
    vmem_limit = int(min(100 << 20, max(32 << 20, need)))
    cost = pl.CostEstimate(flops=int(flops), transcendentals=0,
                           bytes_accessed=int(bytes_acc))
    cparams = pltpu.CompilerParams(dimension_semantics=("parallel",),
                                   vmem_limit_bytes=vmem_limit)

    if not use_gather:
        # ---------------- Path A: one-hot MXU gather (small 2N) ----------------
        out_padded = pl.pallas_call(
            _metalayer_onehot_kernel,
            out_shape=jax.ShapeDtypeStruct((e_pad, fp), out_dtype),
            grid=(num_tiles,),
            in_specs=[
                pl.BlockSpec((te, 1), lambda i: (i, 0)),         # r indices   (rotating)
                pl.BlockSpec((te, 1), lambda i: (i, 0)),         # c indices   (rotating)
                pl.BlockSpec((te, fe1), lambda i: (i, 0)),       # [edge_attr | 1]
                pl.BlockSpec((2 * n, fp), lambda i: (0, 0)),     # P table     (invariant)
                pl.BlockSpec((fe1, fp), lambda i: (0, 0)),       # [W_e ; b]   (invariant)
            ],
            out_specs=pl.BlockSpec((te, fp), lambda i: (i, 0)),
            compiler_params=cparams,
            cost_estimate=cost,
        )(r_idx.reshape(e_pad, 1), c_idx.reshape(e_pad, 1),
          eattr_aug, p_stack, w_e_aug)
    else:
        # ---------------- Path B: SMEM-prefetched indices + DMA row gather -----
        grid_spec = pltpu.PrefetchScalarGridSpec(
            num_scalar_prefetch=2,
            grid=(num_tiles,),
            in_specs=[
                pl.BlockSpec((te, fe1), lambda i, r, c: (i, 0)),   # [edge_attr | 1]
                pl.BlockSpec((fe1, fp), lambda i, r, c: (0, 0)),   # [W_e ; b]
                pl.BlockSpec(memory_space=pl.ANY),                 # P stays in HBM
            ],
            out_specs=pl.BlockSpec((te, fp), lambda i, r, c: (i, 0)),
            scratch_shapes=[
                pltpu.VMEM((te, fp), mxu_dtype),                   # gathered P[r] rows
                pltpu.VMEM((te, fp), mxu_dtype),                   # gathered P[N + c] rows
                pltpu.SemaphoreType.DMA((2,)),
            ])
        out_padded = pl.pallas_call(
            _metalayer_gather_kernel,
            out_shape=jax.ShapeDtypeStruct((e_pad, fp), out_dtype),
            grid_spec=grid_spec,
            compiler_params=cparams,
            cost_estimate=cost,
        )(r_idx, c_idx, eattr_aug, w_e_aug, p_stack)

    new_edge_attr = out_padded[:e, :fout]
    # node_model is None -> feats and edge_index pass through unchanged.
    return feats, edge_index, new_edge_attr


def _reference(feats, edge_index, edge_attr, w, b, precision=None):
    r = edge_index[:, 0]
    c = edge_index[:, 1]
    cat = jnp.concatenate([feats[r], feats[c], edge_attr], axis=1)
    return feats, edge_index, jnp.dot(cat, w, precision=precision) + b


if __name__ == "__main__":
    def make_problem(key, n, f, e, fe, fout):
        k1, k2, k3, k4, k5 = jax.random.split(key, 5)
        feats = jax.random.normal(k1, (n, f), jnp.float32)
        edge_index = jax.random.randint(k2, (e, 2), 0, n, dtype=jnp.int32)
        edge_attr = jax.random.normal(k3, (e, fe), jnp.float32)
        fan_in = 2 * f + fe                       # nn.Linear-style uniform init
        bound = 1.0 / (fan_in ** 0.5)
        w = jax.random.uniform(k4, (fan_in, fout), jnp.float32, -bound, bound)
        b = jax.random.uniform(k5, (fout,), jnp.float32, -bound, bound)
        return feats, edge_index, edge_attr, w, b

    key = jax.random.PRNGKey(0)
    k_small, k_big = jax.random.split(key)

    # 1) Small graph -> one-hot path (2N <= 512), f32 MXU operands, exact precompute.
    feats, ei, ea, w, b = make_problem(k_small, 8, 32, 16, 16, 32)
    of, oi, oe = meta_layer_forward(feats, ei, ea, w, b,
                                    precompute_precision="highest")
    jax.block_until_ready(oe)
    rf, ri, re = _reference(feats, ei, ea, w, b, precision="highest")
    assert of.shape == rf.shape and bool(jnp.allclose(of, rf))
    assert bool(jnp.array_equal(oi, ri))
    assert oe.shape == re.shape
    assert bool(jnp.allclose(oe, re, atol=1e-4, rtol=1e-4)), \
        float(jnp.abs(oe - re).max())

    # 2) Same graph, forced DMA-gather path (the large-N design), still exact rows.
    _, _, oe_g = meta_layer_forward(feats, ei, ea, w, b, gather=True,
                                    precompute_precision="highest")
    jax.block_until_ready(oe_g)
    assert bool(jnp.allclose(oe_g, re, atol=1e-4, rtol=1e-4)), \
        float(jnp.abs(oe_g - re).max())

    # 3) bf16 MXU operands (v6e/v7x fast config), default-precision precompute.
    _, _, oe_bf = meta_layer_forward(feats, ei, ea, w, b, mxu_dtype=jnp.bfloat16)
    jax.block_until_ready(oe_bf)
    assert bool(jnp.allclose(oe_bf, re, atol=3e-2, rtol=3e-2)), \
        float(jnp.abs(oe_bf - re).max())

    # 4) Larger graph: 2N > 512 auto-selects the gather path, multiple edge tiles,
    #    Fout=96 exercises the lane-padding + slice-back path.
    feats, ei, ea, w, b = make_problem(k_big, 300, 64, 400, 16, 96)
    _, _, oe_big = meta_layer_forward(feats, ei, ea, w, b,
                                      precompute_precision="highest")
    jax.block_until_ready(oe_big)
    _, _, re_big = _reference(feats, ei, ea, w, b, precision="highest")
    assert oe_big.shape == re_big.shape
    assert bool(jnp.allclose(oe_big, re_big, atol=1e-4, rtol=1e-4)), \
        float(jnp.abs(oe_big - re_big).max())

    # TODO(synk): edge_model / node_model are arbitrary injected submodules in the
    # original class; here edge_model is instantiated as a Linear and node_model=None.
    print("KERNEL_OK")
</pallas_src>

<mosaic_0001>
module attributes {stable_mosaic.version = 11 : i64} {
  func.func @_metalayer_onehot_kernel(%arg0: i32, %arg1: memref<8x1xi32, #tpu.memory_space<vmem>>, %arg2: memref<8x1xi32, #tpu.memory_space<vmem>>, %arg3: memref<8x17xf32, #tpu.memory_space<vmem>>, %arg4: memref<16x128xf32, #tpu.memory_space<vmem>>, %arg5: memref<17x128xf32, #tpu.memory_space<vmem>>, %arg6: memref<8x128xf32, #tpu.memory_space<vmem>>) attributes {dimension_semantics = [#tpu.dimension_semantics<parallel>], iteration_bounds = array<i64: 2>, scalar_prefetch = 0 : i64, scratch_operands = 0 : i64, tpu.core_type = #tpu.core_type<tc>, window_params = [{transform_indices = @transform_0, window_bounds = array<i64: 8, 1>}, {transform_indices = @transform_1, window_bounds = array<i64: 8, 1>}, {transform_indices = @transform_2, window_bounds = array<i64: 8, 17>}, {pipeline_mode = #tpu.pipeline_mode<synchronous>, transform_indices = @transform_3, window_bounds = array<i64: 16, 128>}, {pipeline_mode = #tpu.pipeline_mode<synchronous>, transform_indices = @transform_4, window_bounds = array<i64: 17, 128>}, {transform_indices = @transform_5, window_bounds = array<i64: 8, 128>}]} {
    %0 = tpu.iota {dimensions = array<i32: 1>} : vector<1x16xi32>
    %c0 = arith.constant 0 : index
    %c0_0 = arith.constant 0 : index
    %1 = vector.load %arg1[%c0, %c0_0] : memref<8x1xi32, #tpu.memory_space<vmem>>, vector<8x1xi32>
    %2 = vector.broadcast %0 : vector<1x16xi32> to vector<8x16xi32>
    %3 = vector.broadcast %1 : vector<8x1xi32> to vector<8x16xi32>
    %4 = arith.cmpi eq, %2, %3 : vector<8x16xi32>
    %c0_1 = arith.constant 0 : index
    %c0_2 = arith.constant 0 : index
    %5 = vector.load %arg2[%c0_1, %c0_2] : memref<8x1xi32, #tpu.memory_space<vmem>>, vector<8x1xi32>
    %6 = vector.broadcast %0 : vector<1x16xi32> to vector<8x16xi32>
    %7 = vector.broadcast %5 : vector<8x1xi32> to vector<8x16xi32>
    %8 = arith.cmpi eq, %6, %7 : vector<8x16xi32>
    %9 = arith.ori %4, %8 : vector<8x16xi1>
    %10 = arith.extui %9 : vector<8x16xi1> to vector<8x16xi32>
    %11 = arith.sitofp %10 : vector<8x16xi32> to vector<8x16xf32>
    %c0_3 = arith.constant 0 : index
    %c0_4 = arith.constant 0 : index
    %12 = vector.load %arg4[%c0_3, %c0_4] : memref<16x128xf32, #tpu.memory_space<vmem>>, vector<16x128xf32>
    %cst = arith.constant dense<0.000000e+00> : vector<8x128xf32>
    %13 = tpu.matmul %11, %12, %cst {dimension_numbers = #tpu.dot_dimension_numbers<[1], [0], [0], [1], [0, 0, 1, 1], [], []>} : vector<8x16xf32>, vector<16x128xf32>, vector<8x128xf32> -> vector<8x128xf32>
    %c0_5 = arith.constant 0 : index
    %c0_6 = arith.constant 0 : index
    %14 = vector.load %arg3[%c0_5, %c0_6] : memref<8x17xf32, #tpu.memory_space<vmem>>, vector<8x17xf32>
    %c0_7 = arith.constant 0 : index
    %c0_8 = arith.constant 0 : index
    %15 = vector.load %arg5[%c0_7, %c0_8] : memref<17x128xf32, #tpu.memory_space<vmem>>, vector<17x128xf32>
    %cst_9 = arith.constant dense<0.000000e+00> : vector<8x128xf32>
    %16 = tpu.matmul %14, %15, %cst_9 {dimension_numbers = #tpu.dot_dimension_numbers<[1], [0], [0], [1], [0, 0, 1, 1], [], []>} : vector<8x17xf32>, vector<17x128xf32>, vector<8x128xf32> -> vector<8x128xf32>
    %17 = arith.addf %13, %16 : vector<8x128xf32>
    %c0_10 = arith.constant 0 : index
    %c0_11 = arith.constant 0 : index
    %18 = vector.load %arg6[%c0_10, %c0_11] : memref<8x128xf32, #tpu.memory_space<vmem>>, vector<8x128xf32>
    tpu.vector_store %arg6[%c0_10, %c0_11], %17 {strides = array<i32>} : memref<8x128xf32, #tpu.memory_space<vmem>>, vector<8x128xf32>,
    return
  }
  func.func @transform_0(%arg0: i32) -> (i32, i32) {
    %c0_i32 = arith.constant 0 : i32
    %c0_i32_0 = arith.constant 0 : i32
    return %arg0, %c0_i32 : i32, i32
  }
  func.func @transform_1(%arg0: i32) -> (i32, i32) {
    %c0_i32 = arith.constant 0 : i32
    %c0_i32_0 = arith.constant 0 : i32
    return %arg0, %c0_i32 : i32, i32
  }
  func.func @transform_2(%arg0: i32) -> (i32, i32) {
    %c0_i32 = arith.constant 0 : i32
    %c0_i32_0 = arith.constant 0 : i32
    return %arg0, %c0_i32 : i32, i32
  }
  func.func @transform_3(%arg0: i32) -> (i32, i32) {
    %c0_i32 = arith.constant 0 : i32
    %c0_i32_0 = arith.constant 0 : i32
    %c0_i32_1 = arith.constant 0 : i32
    return %c0_i32, %c0_i32_0 : i32, i32
  }
  func.func @transform_4(%arg0: i32) -> (i32, i32) {
    %c0_i32 = arith.constant 0 : i32
    %c0_i32_0 = arith.constant 0 : i32
    %c0_i32_1 = arith.constant 0 : i32
    return %c0_i32, %c0_i32_0 : i32, i32
  }
  func.func @transform_5(%arg0: i32) -> (i32, i32) {
    %c0_i32 = arith.constant 0 : i32
    %c0_i32_0 = arith.constant 0 : i32
    return %arg0, %c0_i32 : i32, i32
  }
}

</mosaic_0001>

<llo_original>
// kernel: meta_layer_forward.1
$region0: #{meta_layer_forward.1}
  #allocation0 [shape = 'u32[]', space=smem, size = 0x4, offset = 0x4, fixed_abs, tag = 'smem constant byte address 0x4 - core index']
  #allocation1 [shape = 'u32[144,128]{1,0:T(1,128)}', space=vmem, size = 0x12000, scoped, tag = 'internal scratch']
  %s0 = inlined_call_operand.vmem [shape: s32[16,1], index: 0, kind: input, shape index: {}]
  %s1 = inlined_call_operand.vmem [shape: s32[16,1], index: 1, kind: input, shape index: {}]
  %s2 = inlined_call_operand.vmem [shape: f32[16,17], index: 2, kind: input, shape index: {}]
  %s3 = inlined_call_operand.vmem [shape: f32[16,128], index: 3, kind: input, shape index: {}]
  %s4 = inlined_call_operand.vmem [shape: f32[17,128], index: 4, kind: input, shape index: {}]
  %s5 = inlined_call_operand.hbm [shape: f32[16,128], index: 5, kind: output, shape index: {}]
  %s6 = sld [smem:[#allocation0]]
  $region53: #{meta_layer_forward.1} parent=0
    _
  %s8 = ssub.s32 1, %s6
  %s9 = scalar_select 0, %s8, %s6
  $region1: #{meta_layer_forward.1} parent=0
    #allocation2 [shape = 'u8[8192]{0}', space=vmem, size = 0x2000, scoped, tag = 'output window, operand 0']
    #allocation3 [shape = 's32[2]{0}', space=sflag, size = 0x8, scoped, tag = 'scoped memory for meta_layer_forward.1']
    %10 = vsyncpa [#allocation3], 0
    %s11 = scalar_lea.sflag [#allocation3], 1
    %12 = vsyncpa %s11, 0
    loop: start=0, step=1, limit=4
    $region2: #{meta_layer_forward.1} parent=1 // loop_pre_header
      _
    $region3: #{meta_layer_forward.1} parent=1 // loop_header
      %s14 = sphi 0, %s18
      %p15 = scmp.ge.s32.totalorder %s14, 4
      %s24 = sphi 0, %s26
      %s27 = sphi 0, %s24
      %s28 = sphi 0, %s27
      %s44 = sphi 0, %s28
      %s50 = sphi 0, %s52
      %s53 = sphi 0, %s50
      %s54 = sphi 0, %s53
      %s70 = sphi 0, %s54
      %s76 = sphi 0, %s78
      %s79 = sphi 0, %s76
      %s80 = sphi 0, %s79
      %s96 = sphi 0, %s80
      %s100 = sphi 0, %s100
      %s102 = sphi 0, %s100
      %s103 = sphi 0, %s102
      %s117 = sphi 0, %s103
      %s121 = sphi 0, %s121
      %s123 = sphi 0, %s121
      %s124 = sphi 0, %s123
      %s138 = sphi 0, %s124
      %s144 = sphi 0, %s146
      %s147 = sphi 0, %s144
      %s148 = sphi 0, %s147
      %s164 = sphi 0, %s148
    $region4: #{meta_layer_forward.1} parent=1 // loop_header_branch
      %17 = sbr.rel (%p15) target = $region8
    $region5: #{meta_layer_forward.1} parent=1 // loop_body
      %s19 = ssub.s32 %s14, 1
      %s20 = ssub.s32 %s14, 2
      %s21 = sadd.s32 %s14, 1
      %s22 = ssub.s32 %s14, %s21
      %p23 = scmp.eq.s32.totalorder %s22, 0
      %s25 = sadd.s32 %s24, 1
      %s26 = scalar_select %p23, %s24, %s25
      %p29 = pneg %p23
      %p30 = scmp.eq.s32.totalorder %s14, 1
      %p31 = por %p29, %p30
      %p32 = scmp.ne.s32.totalorder %s24, %s27
      %p33 = scmp.eq.s32.totalorder %s14, 0
      %p34 = por %p32, %p33
      %p35 = scmp.ne.s32.totalorder %s24, %s27
      %p36 = scmp.eq.s32.totalorder %s19, 1
      %p37 = por %p35, %p36
      %p38 = scmp.ne.s32.totalorder %s27, %s28
      %p39 = scmp.eq.s32.totalorder %s19, 0
      %p40 = por %p38, %p39
      %p41 = scmp.ne.s32.totalorder %s27, %s28
      %p42 = scmp.eq.s32.totalorder %s20, 1
      %p43 = por %p41, %p42
      %p45 = scmp.ne.s32.totalorder %s28, %s44
      %p46 = scmp.eq.s32.totalorder %s20, 0
      %p47 = por %p45, %p46
      %s48 = ssub.s32 %s14, %s21
      %p49 = scmp.eq.s32.totalorder %s48, 0
      %s51 = sadd.s32 %s50, 1
      %s52 = scalar_select %p49, %s50, %s51
      %p55 = pneg %p49
      %p56 = scmp.eq.s32.totalorder %s14, 1
      %p57 = por %p55, %p56
      %p58 = scmp.ne.s32.totalorder %s50, %s53
      %p59 = scmp.eq.s32.totalorder %s14, 0
      %p60 = por %p58, %p59
      %p61 = scmp.ne.s32.totalorder %s50, %s53
      %p62 = scmp.eq.s32.totalorder %s19, 1
      %p63 = por %p61, %p62
      %p64 = scmp.ne.s32.totalorder %s53, %s54
      %p65 = scmp.eq.s32.totalorder %s19, 0
      %p66 = por %p64, %p65
      %p67 = scmp.ne.s32.totalorder %s53, %s54
      %p68 = scmp.eq.s32.totalorder %s20, 1
      %p69 = por %p67, %p68
      %p71 = scmp.ne.s32.totalorder %s54, %s70
      %p72 = scmp.eq.s32.totalorder %s20, 0
      %p73 = por %p71, %p72
      %s74 = ssub.s32 %s14, %s21
      %p75 = scmp.eq.s32.totalorder %s74, 0
      %s77 = sadd.s32 %s76, 1
      %s78 = scalar_select %p75, %s76, %s77
      %p81 = pneg %p75
      %p82 = scmp.eq.s32.totalorder %s14, 1
      %p83 = por %p81, %p82
      %p84 = scmp.ne.s32.totalorder %s76, %s79
      %p85 = scmp.eq.s32.totalorder %s14, 0
      %p86 = por %p84, %p85
      %p87 = scmp.ne.s32.totalorder %s76, %s79
      %p88 = scmp.eq.s32.totalorder %s19, 1
      %p89 = por %p87, %p88
      %p90 = scmp.ne.s32.totalorder %s79, %s80
      %p91 = scmp.eq.s32.totalorder %s19, 0
      %p92 = por %p90, %p91
      %p93 = scmp.ne.s32.totalorder %s79, %s80
      %p94 = scmp.eq.s32.totalorder %s20, 1
      %p95 = por %p93, %p94
      %p97 = scmp.ne.s32.totalorder %s80, %s96
      %p98 = scmp.eq.s32.totalorder %s20, 0
      %p99 = por %p97, %p98
      %s101 = sadd.s32 %s100, 1
      %p104 = scmp.eq.s32.totalorder %s14, 1
      %p105 = scmp.ne.s32.totalorder %s100, %s102
      %p106 = scmp.eq.s32.totalorder %s14, 0
      %p107 = por %p105, %p106
      %p108 = scmp.ne.s32.totalorder %s100, %s102
      %p109 = scmp.eq.s32.totalorder %s19, 1
      %p110 = por %p108, %p109
      %p111 = scmp.ne.s32.totalorder %s102, %s103
      %p112 = scmp.eq.s32.totalorder %s19, 0
      %p113 = por %p111, %p112
      %p114 = scmp.ne.s32.totalorder %s102, %s103
      %p115 = scmp.eq.s32.totalorder %s20, 1
      %p116 = por %p114, %p115
      %p118 = scmp.ne.s32.totalorder %s103, %s117
      %p119 = scmp.eq.s32.totalorder %s20, 0
      %p120 = por %p118, %p119
      %s122 = sadd.s32 %s121, 1
      %p125 = scmp.eq.s32.totalorder %s14, 1
      %p126 = scmp.ne.s32.totalorder %s121, %s123
      %p127 = scmp.eq.s32.totalorder %s14, 0
      %p128 = por %p126, %p127
      %p129 = scmp.ne.s32.totalorder %s121, %s123
      %p130 = scmp.eq.s32.totalorder %s19, 1
      %p131 = por %p129, %p130
      %p132 = scmp.ne.s32.totalorder %s123, %s124
      %p133 = scmp.eq.s32.totalorder %s19, 0
      %p134 = por %p132, %p133
      %p135 = scmp.ne.s32.totalorder %s123, %s124
      %p136 = scmp.eq.s32.totalorder %s20, 1
      %p137 = por %p135, %p136
      %p139 = scmp.ne.s32.totalorder %s124, %s138
      %p140 = scmp.eq.s32.totalorder %s20, 0
      %p141 = por %p139, %p140
      %s142 = ssub.s32 %s14, %s21
      %p143 = scmp.eq.s32.totalorder %s142, 0
      %s145 = sadd.s32 %s144, 1
      %s146 = scalar_select %p143, %s144, %s145
      %p149 = pneg %p143
      %p150 = scmp.eq.s32.totalorder %s14, 1
      %p151 = por %p149, %p150
      %p152 = scmp.ne.s32.totalorder %s144, %s147
      %p153 = scmp.eq.s32.totalorder %s14, 0
      %p154 = por %p152, %p153
      %p155 = scmp.ne.s32.totalorder %s144, %s147
      %p156 = scmp.eq.s32.totalorder %s19, 1
      %p157 = por %p155, %p156
      %p158 = scmp.ne.s32.totalorder %s147, %s148
      %p159 = scmp.eq.s32.totalorder %s19, 0
      %p160 = por %p158, %p159
      %p161 = scmp.ne.s32.totalorder %s147, %s148
      %p162 = scmp.eq.s32.totalorder %s20, 1
      %p163 = por %p161, %p162
      %p165 = scmp.ne.s32.totalorder %s148, %s164
      %p166 = scmp.eq.s32.totalorder %s20, 0
      %p167 = por %p165, %p166
      %p168 = scmp.le.s32.totalorder 1, %s14
      %p169 = scmp.lt.s32.totalorder %s14, 3
      %p170 = pnand %p168, %p169
      %p171 = pneg %p170
      // Predicated region
      $region9: #{meta_layer_forward.1} parent=5 // pred_check
        _
      $region10: #{meta_layer_forward.1} parent=5 // pred_check_branch
        %173 = sbr.rel (%p170) target = $region12
      $region11: #{meta_layer_forward.1} parent=5 // pred_region
        %s174 = ssub.s32 %s14, 1
        // Predicated region
        $region13: #{meta_layer_forward.1} parent=11 // pred_check
          %p175 = pneg %p113
        $region14: #{meta_layer_forward.1} parent=11 // pred_check_branch
          %177 = sbr.rel (%p175) target = $region16
        $region15: #{meta_layer_forward.1} parent=11 // pred_region
          _
        $region16: #{meta_layer_forward.1} parent=11 // pred_fallthru
          _
        // Predicated region
        $region17: #{meta_layer_forward.1} parent=11 // pred_check
          %p178 = pneg %p134
        $region18: #{meta_layer_forward.1} parent=11 // pred_check_branch
          %180 = sbr.rel (%p178) target = $region20
        $region19: #{meta_layer_forward.1} parent=11 // pred_region
          _
        $region20: #{meta_layer_forward.1} parent=11 // pred_fallthru
          _
      $region12: #{meta_layer_forward.1} parent=5 // pred_fallthru
        _
      %p181 = scmp.lt.s32.totalorder %s14, 2
      // Predicated region
      $region21: #{meta_layer_forward.1} parent=5 // pred_check
        %p182 = pneg %p181
      $region22: #{meta_layer_forward.1} parent=5 // pred_check_branch
        %184 = sbr.rel (%p182) target = $region24
      $region23: #{meta_layer_forward.1} parent=5 // pred_region
        // Predicated region
        $region25: #{meta_layer_forward.1} parent=23 // pred_check
          %p185 = pneg %p34
        $region26: #{meta_layer_forward.1} parent=23 // pred_check_branch
          %187 = sbr.rel (%p185) target = $region28
        $region27: #{meta_layer_forward.1} parent=23 // pred_region
          %p188 = scmp.lt.s32.totalorder %s14, 1
          %s189 = scalar_select %p188, %s14, 1
          %s190 = smul.addr %s189, 8
          %s191 = scalar_lea.vmem %s0, %s190
        $region28: #{meta_layer_forward.1} parent=23 // pred_fallthru
          _
        // Predicated region
        $region29: #{meta_layer_forward.1} parent=23 // pred_check
          %p192 = pneg %p60
        $region30: #{meta_layer_forward.1} parent=23 // pred_check_branch
          %194 = sbr.rel (%p192) target = $region32
        $region31: #{meta_layer_forward.1} parent=23 // pred_region
          %p195 = scmp.lt.s32.totalorder %s14, 1
          %s196 = scalar_select %p195, %s14, 1
          %s197 = smul.addr %s196, 8
          %s198 = scalar_lea.vmem %s1, %s197
        $region32: #{meta_layer_forward.1} parent=23 // pred_fallthru
          _
        // Predicated region
        $region33: #{meta_layer_forward.1} parent=23 // pred_check
          %p199 = pneg %p86
        $region34: #{meta_layer_forward.1} parent=23 // pred_check_branch
          %201 = sbr.rel (%p199) target = $region36
        $region35: #{meta_layer_forward.1} parent=23 // pred_region
          %p202 = scmp.lt.s32.totalorder %s14, 1
          %s203 = scalar_select %p202, %s14, 1
          %s204 = smul.addr %s203, 8
          %s205 = scalar_lea.vmem %s2, %s204
        $region36: #{meta_layer_forward.1} parent=23 // pred_fallthru
          _
      $region24: #{meta_layer_forward.1} parent=5 // pred_fallthru
        _
      %p206 = scmp.le.s32.totalorder 1, %s14
      %p207 = scmp.lt.s32.totalorder %s14, 3
      %p208 = pnand %p206, %p207
      %p209 = pneg %p208
      // Predicated region
      $region37: #{meta_layer_forward.1} parent=5 // pred_check
        _
      $region38: #{meta_layer_forward.1} parent=5 // pred_check_branch
        %211 = sbr.rel (%p208) target = $region40
      $region39: #{meta_layer_forward.1} parent=5 // pred_region
        %s212 = ssub.s32 %s14, 1
        %p213 = scmp.lt.s32.totalorder %s19, 1
        %s214 = scalar_select %p213, %s19, 1
        %s215 = smul.addr %s214, 8
        %s216 = scalar_lea.vmem %s0, %s215
        %p217 = pneg %p40
        %p218 = pneg %p37
        %p219 = scmp.lt.s32.totalorder %s19, 1
        %s220 = scalar_select %p219, %s19, 1
        %s221 = smul.addr %s220, 8
        %s222 = scalar_lea.vmem %s1, %s221
        %p223 = pneg %p66
        %p224 = pneg %p63
        %p225 = scmp.lt.s32.totalorder %s19, 1
        %s226 = scalar_select %p225, %s19, 1
        %s227 = smul.addr %s226, 8
        %s228 = scalar_lea.vmem %s2, %s227
        %p229 = pneg %p92
        %p230 = pneg %p89
        %p231 = pneg %p113
        %p232 = pneg %p110
        %p233 = pneg %p134
        %p234 = pneg %p131
        %p235 = pneg %p160
        %p236 = pneg %p157
        %s237 = sand.u32 %s147, 1
        %s238 = scalar_lea.sflag [#allocation3], %s237
        %s239 = sand.u32 %s147, 1
        %s240 = smul.addr %s239, 8
        %s241 = scalar_lea.vmem [#allocation2], %s240
        %p242 = scmp.lt.s32.totalorder %s19, 1
        %s243 = scalar_select %p242, %s19, 1
        %s244 = smul.addr %s243, 8
        %s245 = scalar_lea.vmem %s0, %s244
        %p246 = scmp.lt.s32.totalorder %s19, 1
        %s247 = scalar_select %p246, %s19, 1
        %s248 = smul.addr %s247, 8
        %s249 = scalar_lea.vmem %s1, %s248
        %p250 = scmp.lt.s32.totalorder %s19, 1
        %s251 = scalar_select %p250, %s19, 1
        %s252 = smul.addr %s251, 8
        %s253 = scalar_lea.vmem %s2, %s252
        %v254 = vlaneseq
        %v255 = vand.u32 %v254, 127
        %v256 = vld [vmem:[%s245] sm:$0xff]
        %257 = vset.pattern.permute.xlu0 0
        %258 = vperm.xlu0 %257, %v256
        %v259 = vpop.permute.xlu0 %258
        %vm260 = vcmp.eq.s32.totalorder %v255, %v259
        %v261 = vld [vmem:[%s249] sm:$0xff]
        %262 = vset.pattern.permute.xlu0 0
        %263 = vperm.xlu0 %262, %v261
        %v264 = vpop.permute.xlu0 %263
        %vm265 = vcmp.eq.s32.totalorder %v255, %v264
        %vm266 = vmor %vm260, %vm265
        %v267 = vsel %vm266, 1, 0
        %v268 = vcvt.s32.f32 %v267
        %v269 = vld [vmem:[%s3] sm:$0xff]
        %v270 = vld [vmem:[%s3 + $0x8] sm:$0xff]
        %v271 = vld [vmem:[%s253] sm:$0xff]
        %v272 = vld [vmem:[%s4] sm:$0xff]
        %v273 = vld [vmem:[%s4 + $0x8] sm:$0xff]
        %v274 = vld [vmem:[%s4 + $0x10] sm:$0x1]
        %vm275 = vcmask 138240
        %v277 = vsel %vm275, %v271, 0
        %vm279 = vcmask 1040384
        %v281 = vsel %vm279, %v274, 0
        %283 = vmatprep.subr.mxu0 0.0
        %284 = vmatpush1.msra.mxu0 %v272
        %285 = vmatprep.subr.mxu0 0.0
        %286 = vmatpush1.msra.mxu0 %v273
        %287 = vmatprep.subr.mxu0 0.0
        %288 = vmatpush1.msra.mxu0 %v281
        %289 = vmatprep.subr.mxu0 0.0
        %290 = vmatpush1.msra.mxu0 0.0
        %291 = vmatprep.subr.mxu0 0.0
        %292 = vmatpush1.msra.mxu0 0.0
        %293 = vmatprep.subr.mxu0 0.0
        %294 = vmatpush1.msra.mxu0 0.0
        %295 = vmatprep.subr.mxu0 0.0
        %296 = vmatpush1.msra.mxu0 0.0
        %297 = vmatprep.subr.mxu0 0.0
        %298 = vmatpush1.msra.mxu0 0.0
        %299 = vmatprep.subr.mxu0 0.0
        %300 = vmatpush1.msra.mxu0 0.0
        %301 = vmatprep.subr.mxu0 0.0
        %302 = vmatpush1.msra.mxu0 0.0
        %303 = vmatprep.subr.mxu0 0.0
        %304 = vmatpush1.msra.mxu0 0.0
        %305 = vmatprep.subr.mxu0 0.0
        %306 = vmatpush1.msra.mxu0 0.0
        %307 = vmatprep.subr.mxu0 0.0
        %308 = vmatpush1.msra.mxu0 0.0
        %309 = vmatprep.subr.mxu0 0.0
        %310 = vmatpush1.msra.mxu0 0.0
        %311 = vmatprep.subr.mxu0 0.0
        %312 = vmatpush1.msra.mxu0 0.0
        %313 = vmatprep.subr.mxu0 0.0
        %314 = vmatpush1.msra.mxu0 0.0
        %315 = vmatprep.subr.mxu0 0.0
        %316 = vmatpush1.msra.mxu0 0.0
        %317 = vmatprep.subr.mxu0 0.0
        %318 = vmatpush1.msra.mxu0 0.0
        %319 = vmatprep.subr.mxu0 0.0
        %320 = vmatpush1.msra.mxu0 0.0
        %321 = vmatprep.subr.mxu0 0.0
        %322 = vmatpush1.msra.mxu0 0.0
        %323 = vmatprep.subr.mxu0 0.0
        %324 = vmatpush1.msra.mxu0 0.0
        %325 = vmatprep.subr.mxu0 0.0
        %326 = vmatpush1.msra.mxu0 0.0
        %327 = vmatprep.subr.mxu0 0.0
        %328 = vmatpush1.msra.mxu0 0.0
        %329 = vmatprep.subr.mxu0 0.0
        %330 = vmatpush1.msra.mxu0 0.0
        %331 = vmatprep.subr.mxu0 0.0
        %332 = vmatpush1.msra.mxu0 0.0
        %333 = vmatprep.subr.mxu0 0.0
        %334 = vmatpush1.msra.mxu0 0.0
        %335 = vmatprep.subr.mxu0 0.0
        %336 = vmatpush1.msra.mxu0 0.0
        %337 = vmatprep.subr.mxu0 0.0
        %338 = vmatpush1.msra.mxu0 0.0
        %339 = vmatprep.subr.mxu0 0.0
        %340 = vmatpush1.msra.mxu0 0.0
        %341 = vmatprep.subr.mxu0 0.0
        %342 = vmatpush1.msra.mxu0 0.0
        %343 = vmatprep.subr.mxu0 0.0
        %344 = vmatpush1.msra.mxu0 0.0
        %345 = vmatprep.subr.mxu0 0.0
        %346 = vmatpush1.msra.mxu0 0.0
        %347 = vmatprep.mubr.f32.mxu0 0.0
        %348 = vmatmul.mubr.f32.gmra.mrb[0].mxu0 %v277
        %v349 = vpop.f32.mrb[0].mxu0
        %v350 = vadd.f32 0.0, %v349
        %v351 = vpop.f32.mrb[0].mxu0
        %352 = vdwg.mxu0
        %vm353 = vcmask 130048
        %v355 = vsel %vm353, %v268, 0
        %357 = vmatprep.subr.mxu0 0.0
        %358 = vmatpush1.msra.mxu0 %v269
        %359 = vmatprep.subr.mxu0 0.0
        %360 = vmatpush1.msra.mxu0 %v270
        %361 = vmatprep.subr.mxu0 0.0
        %362 = vmatpush1.msra.mxu0 0.0
        %363 = vmatprep.subr.mxu0 0.0
        %364 = vmatpush1.msra.mxu0 0.0
        %365 = vmatprep.subr.mxu0 0.0
        %366 = vmatpush1.msra.mxu0 0.0
        %367 = vmatprep.subr.mxu0 0.0
        %368 = vmatpush1.msra.mxu0 0.0
        %369 = vmatprep.subr.mxu0 0.0
        %370 = vmatpush1.msra.mxu0 0.0
        %371 = vmatprep.subr.mxu0 0.0
        %372 = vmatpush1.msra.mxu0 0.0
        %373 = vmatprep.subr.mxu0 0.0
        %374 = vmatpush1.msra.mxu0 0.0
        %375 = vmatprep.subr.mxu0 0.0
        %376 = vmatpush1.msra.mxu0 0.0
        %377 = vmatprep.subr.mxu0 0.0
        %378 = vmatpush1.msra.mxu0 0.0
        %379 = vmatprep.subr.mxu0 0.0
        %380 = vmatpush1.msra.mxu0 0.0
        %381 = vmatprep.subr.mxu0 0.0
        %382 = vmatpush1.msra.mxu0 0.0
        %383 = vmatprep.subr.mxu0 0.0
        %384 = vmatpush1.msra.mxu0 0.0
        %385 = vmatprep.subr.mxu0 0.0
        %386 = vmatpush1.msra.mxu0 0.0
        %387 = vmatprep.subr.mxu0 0.0
        %388 = vmatpush1.msra.mxu0 0.0
        %389 = vmatprep.subr.mxu0 0.0
        %390 = vmatpush1.msra.mxu0 0.0
        %391 = vmatprep.subr.mxu0 0.0
        %392 = vmatpush1.msra.mxu0 0.0
        %393 = vmatprep.subr.mxu0 0.0
        %394 = vmatpush1.msra.mxu0 0.0
        %395 = vmatprep.subr.mxu0 0.0
        %396 = vmatpush1.msra.mxu0 0.0
        %397 = vmatprep.subr.mxu0 0.0
        %398 = vmatpush1.msra.mxu0 0.0
        %399 = vmatprep.subr.mxu0 0.0
        %400 = vmatpush1.msra.mxu0 0.0
        %401 = vmatprep.subr.mxu0 0.0
        %402 = vmatpush1.msra.mxu0 0.0
        %403 = vmatprep.subr.mxu0 0.0
        %404 = vmatpush1.msra.mxu0 0.0
        %405 = vmatprep.subr.mxu0 0.0
        %406 = vmatpush1.msra.mxu0 0.0
        %407 = vmatprep.subr.mxu0 0.0
        %408 = vmatpush1.msra.mxu0 0.0
        %409 = vmatprep.subr.mxu0 0.0
        %410 = vmatpush1.msra.mxu0 0.0
        %411 = vmatprep.subr.mxu0 0.0
        %412 = vmatpush1.msra.mxu0 0.0
        %413 = vmatprep.subr.mxu0 0.0
        %414 = vmatpush1.msra.mxu0 0.0
        %415 = vmatprep.subr.mxu0 0.0
        %416 = vmatpush1.msra.mxu0 0.0
        %417 = vmatprep.subr.mxu0 0.0
        %418 = vmatpush1.msra.mxu0 0.0
        %419 = vmatprep.subr.mxu0 0.0
        %420 = vmatpush1.msra.mxu0 0.0
        %421 = vmatprep.mubr.f32.mxu0 0.0
        %422 = vmatmul.mubr.f32.gmra.mrb[0].mxu0 %v355
        %v423 = vpop.f32.mrb[0].mxu0
        %v424 = vadd.f32 %v350, %v423
        %v425 = vpop.f32.mrb[0].mxu0
        %426 = vdwg.mxu0
        %427 = vst [vmem:[%s241] sm:$0xff] %v424
        %s428 = sand.u32 %s147, 1
        %s429 = scalar_lea.sflag [#allocation3], %s428
        %s430 = sand.u32 %s147, 1
        %s431 = smul.addr %s430, 8
        %s432 = scalar_lea.vmem [#allocation2], %s431
        // Predicated region
        $region41: #{meta_layer_forward.1} parent=39 // pred_check
          %p433 = pneg %p157
        $region42: #{meta_layer_forward.1} parent=39 // pred_check_branch
          %435 = sbr.rel (%p433) target = $region44
        $region43: #{meta_layer_forward.1} parent=39 // pred_region
          %s437 = ssub.s32 128, 128
          %438 = vsyncadd %s429, %s437
          %s439 = smul.addr %s19, 128
          %s440 = scalar_lea.hbm %s5, %s439
          %s442 = sshll.u32 %s432, 4
          %s443 = int_to_ptr.vmem [resolvable:$true] %s442
          %445 = dma.vmem_to_hbm [thread:$0]  %s443, 128, %s440, %s429
        $region44: #{meta_layer_forward.1} parent=39 // pred_fallthru
          _
      $region40: #{meta_layer_forward.1} parent=5 // pred_fallthru
        _
      %p446 = scmp.le.s32.totalorder 2, %s14
      // Predicated region
      $region45: #{meta_layer_forward.1} parent=5 // pred_check
        %p447 = pneg %p446
      $region46: #{meta_layer_forward.1} parent=5 // pred_check_branch
        %449 = sbr.rel (%p447) target = $region48
      $region47: #{meta_layer_forward.1} parent=5 // pred_region
        %s450 = ssub.s32 %s14, 2
        // Predicated region
        $region49: #{meta_layer_forward.1} parent=47 // pred_check
          %p451 = pneg %p163
        $region50: #{meta_layer_forward.1} parent=47 // pred_check_branch
          %453 = sbr.rel (%p451) target = $region52
        $region51: #{meta_layer_forward.1} parent=47 // pred_region
          %s454 = sand.u32 %s148, 1
          %s455 = scalar_lea.sflag [#allocation3], %s454
          %s456 = sand.u32 %s148, 1
          %s457 = smul.addr %s456, 8
          %s458 = scalar_lea.vmem [#allocation2], %s457
          %459 = dma.done %s455, 128
        $region52: #{meta_layer_forward.1} parent=47 // pred_fallthru
          _
      $region48: #{meta_layer_forward.1} parent=5 // pred_fallthru
        _
    $region6: #{meta_layer_forward.1} parent=1 // loop_footer
      %s18 = sadd.s32 1, %s14
    $region7: #{meta_layer_forward.1} parent=1 // loop_footer_branch
      %13 = sbr.rel target = $region3
    $region8: #{meta_layer_forward.1} parent=1 // loop_exit
      _
    %460 = vsyncpa [#allocation3], 1
    %s461 = scalar_lea.sflag [#allocation3], 1
    %462 = vsyncpa %s461, 1

</llo_original>
